<compile_context>
chip_gen: v6e
topology: v6e:2x2x1
jax: 0.10.0
libtpu: 0.0.40
codegen_flags: <defaults>
</compile_context>

<pallas_src>
import functools
import math

import jax
import jax.numpy as jnp
from jax.experimental import pallas as pl
from jax.experimental.pallas import tpu as pltpu


# ---------------------------------------------------------------------------
# Generation-aware knobs
# ---------------------------------------------------------------------------
@functools.lru_cache(maxsize=1)
def _tpu_generation():
    try:
        kind = jax.devices()[0].device_kind.lower()
    except Exception:
        return 6
    if "v7" in kind or "7x" in kind:
        return 7
    if "v6" in kind:
        return 6
    if "v5" in kind:
        return 5
    return 6


def _vmem_limit_bytes():
    # v7x has 64 MiB physical per-TC VMEM; v5e/v6e have 128 MiB.
    return (32 if _tpu_generation() >= 7 else 64) * 1024 * 1024


def _linear_tile_target():
    # 512-row tiles reach ~85% of HBM roofline on v5e/v6e; keep 256 on v7x
    # (smaller VMEM, faster HBM).
    return 256 if _tpu_generation() >= 7 else 512


# ---------------------------------------------------------------------------
# Linear kernel: y = x @ W + b   (W already transposed to (in, out))
# ---------------------------------------------------------------------------
def _linear_kernel(x_ref, w_ref, b_ref, o_ref):
    acc = jnp.dot(x_ref[...], w_ref[...], preferred_element_type=jnp.float32)
    o_ref[...] = (acc + b_ref[...]).astype(o_ref.dtype)


def _pick_tile_m(m, target):
    """MXU-friendly row tile; caller pads M to a multiple of the result."""
    if m <= target:
        return m
    for t in (target, target // 2, 128, 64, 32, 16, 8):
        if t and m % t == 0:
            return t
    return target  # non-divisible M: pad up to a multiple of `target`


def pallas_linear(x2d, w, b, out_dtype):
    """y = x2d @ w + b with x2d/w in bf16 (f32 accumulate), b in f32."""
    M, K = x2d.shape
    K2, N = w.shape
    assert K == K2
    tm = _pick_tile_m(M, _linear_tile_target())
    m_pad = pl.cdiv(M, tm) * tm
    x_in = x2d if m_pad == M else jnp.pad(x2d, ((0, m_pad - M), (0, 0)))
    grid = (m_pad // tm,)

    flops = 2 * m_pad * K * N
    bytes_accessed = (m_pad * K * x_in.dtype.itemsize
                      + K * N * w.dtype.itemsize
                      + N * b.dtype.itemsize
                      + m_pad * N * jnp.dtype(out_dtype).itemsize)

    out = pl.pallas_call(
        _linear_kernel,
        out_shape=jax.ShapeDtypeStruct((m_pad, N), out_dtype),
        grid=grid,
        in_specs=[
            pl.BlockSpec((tm, K), lambda i: (i, 0)),   # row tile, pipelined
            pl.BlockSpec((K, N), lambda i: (0, 0)),    # weight resident in VMEM
            pl.BlockSpec((1, N), lambda i: (0, 0)),    # bias resident
        ],
        out_specs=pl.BlockSpec((tm, N), lambda i: (i, 0)),
        compiler_params=pltpu.CompilerParams(
            dimension_semantics=("parallel",),
            vmem_limit_bytes=_vmem_limit_bytes(),
        ),
        cost_estimate=pl.CostEstimate(
            flops=int(flops), transcendentals=0,
            bytes_accessed=int(bytes_accessed)),
    )(x_in, w, b.reshape(1, N))
    return out if m_pad == M else out[:M]


# ---------------------------------------------------------------------------
# Attention kernel: grid = (batch, head_group, kv_tile), online softmax.
# One step handles `group` heads (group*D >= 128 lanes, or full C) so the
# output block is lane-dense and maps directly onto (B, T, C) columns.
# ---------------------------------------------------------------------------
def _attn_kernel(q_ref, kt_ref, v_ref, bias_ref, o_ref,
                 m_sc, l_sc, acc_sc, *, group):
    kv = pl.program_id(2)
    nkv = pl.num_programs(2)

    @pl.when(kv == 0)
    def _init():
        # finite sentinel (not -inf) so exp(m_prev - m_new) never hits inf-inf
        m_sc[...] = jnp.full(m_sc.shape, -1e30, m_sc.dtype)
        l_sc[...] = jnp.zeros(l_sc.shape, l_sc.dtype)
        acc_sc[...] = jnp.zeros(acc_sc.shape, acc_sc.dtype)

    bias = bias_ref[0]                       # (1, tk) additive key-padding bias

    # Bounded static loop: group*D <= 128, so at most ~2 heads (Bark) live at
    # once -> (T, tk) f32 temporaries stay small (no vreg/VMEM blowup).
    for g in range(group):
        q = q_ref[0, g]                      # (T, D)  bf16, 1/sqrt(D) folded into W_q
        kt = kt_ref[0, g]                    # (D, tk) bf16, K pre-transposed wrapper-side
        v = v_ref[0, g]                      # (tk, D) bf16
        s = jnp.dot(q, kt, preferred_element_type=jnp.float32) + bias  # (T, tk) f32
        m_prev = m_sc[g]                                               # (T, 1)
        m_new = jnp.maximum(m_prev, jnp.max(s, axis=-1, keepdims=True))
        alpha = jnp.exp(m_prev - m_new)
        p = jnp.exp(s - m_new)
        l_sc[g] = alpha * l_sc[g] + jnp.sum(p, axis=-1, keepdims=True)
        acc_sc[g] = alpha * acc_sc[g] + jnp.dot(
            p.astype(v.dtype), v, preferred_element_type=jnp.float32)
        m_sc[g] = m_new

    @pl.when(kv == nkv - 1)
    def _finalize():
        outs = []
        for g in range(group):
            # guard fully-masked rows (l == 0) -> zeros instead of NaN
            denom = jnp.maximum(l_sc[g], 1e-30)
            outs.append(acc_sc[g] * pl.reciprocal(denom, approx=True))
        # single lane-dense store of the whole (T, group*D) output block
        o_ref[0] = jnp.concatenate(outs, axis=-1).astype(o_ref.dtype)


def _pick_kv_tile(t):
    if t <= 512:
        return t
    for tk in (512, 256, 128):
        if t % tk == 0:
            return tk
    return t  # non-divisible T: fall back to full-T softmax (rare)


def pallas_attention(q, kt, v, bias):
    """q/v: (B,H,T,D) bf16; kt: (B,H,D,T) bf16; bias: (B,1,T) f32. -> (B,T,C)."""
    B, H, T, D = q.shape
    C = H * D
    group = 1 if D >= 128 else max(1, min(H, 128 // D))
    while H % group:
        group -= 1
    tk = _pick_kv_tile(T)
    nkv = T // tk
    grid = (B, H // group, nkv)

    flops = 4 * B * H * T * T * D
    bytes_accessed = ((q.size + kt.size + v.size) * q.dtype.itemsize
                      + bias.size * bias.dtype.itemsize
                      + B * T * C * q.dtype.itemsize)

    kernel = functools.partial(_attn_kernel, group=group)
    return pl.pallas_call(
        kernel,
        out_shape=jax.ShapeDtypeStruct((B, T, C), q.dtype),
        grid=grid,
        in_specs=[
            # q resident across the kv axis
            pl.BlockSpec((1, group, T, D), lambda b, hg, kv: (b, hg, 0, 0)),
            pl.BlockSpec((1, group, D, tk), lambda b, hg, kv: (b, hg, 0, kv)),
            pl.BlockSpec((1, group, tk, D), lambda b, hg, kv: (b, hg, kv, 0)),
            pl.BlockSpec((1, 1, tk), lambda b, hg, kv: (b, 0, kv)),
        ],
        # constant across kv -> accumulator block, written once at the last kv
        out_specs=pl.BlockSpec((1, T, group * D), lambda b, hg, kv: (b, 0, hg)),
        scratch_shapes=[
            pltpu.VMEM((group, T, 1), jnp.float32),   # running max
            pltpu.VMEM((group, T, 1), jnp.float32),   # running denom
            pltpu.VMEM((group, T, D), jnp.float32),   # running numerator
        ],
        compiler_params=pltpu.CompilerParams(
            dimension_semantics=("parallel", "parallel", "arbitrary"),
            vmem_limit_bytes=_vmem_limit_bytes(),
        ),
        cost_estimate=pl.CostEstimate(
            flops=int(flops), transcendentals=int(B * H * T * T),
            bytes_accessed=int(bytes_accessed)),
    )(q, kt, v, bias)


# ---------------------------------------------------------------------------
# One-time parameter preparation (load-time transform, not per-call)
# ---------------------------------------------------------------------------
def prepare_params(w_attn, b_attn, w_proj, b_proj, n_head):
    """Transpose PyTorch (out,in) weights to (in,out), fold 1/sqrt(D) into the
    Q projection, cast matmul weights to bf16, keep biases f32."""
    C = w_proj.shape[0]
    D = C // n_head
    scale = 1.0 / math.sqrt(D)
    w_attn_t = w_attn.T.astype(jnp.float32)            # (C, 3C)
    w_attn_t = w_attn_t.at[:, :C].multiply(scale)      # scale Q columns
    b_attn_s = b_attn.astype(jnp.float32).at[:C].multiply(scale)
    return (w_attn_t.astype(jnp.bfloat16), b_attn_s,
            w_proj.T.astype(jnp.bfloat16), b_proj.astype(jnp.float32))


# ---------------------------------------------------------------------------
# Full module forward
# ---------------------------------------------------------------------------
def non_causal_self_attention(x, prepared_params, n_head, pad_mask=None):
    """x: (B, T, C); pad_mask: (B, T) bool, True=keep. Returns (B, T, C)."""
    B, T, C = x.shape
    assert C % n_head == 0
    D = C // n_head
    w_attn, b_attn, w_proj, b_proj = prepared_params

    # bf16 at the pallas_call boundary: halves DMA bytes, feeds the bf16 MXU.
    x_bf = x.astype(jnp.bfloat16)

    # fused QKV projection (scale for Q already folded into the weights)
    qkv = pallas_linear(x_bf.reshape(B * T, C), w_attn, b_attn, jnp.bfloat16)

    # wrapper-side layout plumbing: per-head slabs, K pre-transposed to (D, T)
    qkv = qkv.reshape(B, T, 3, n_head, D)
    q = qkv[:, :, 0].transpose(0, 2, 1, 3)    # (B, H, T, D)
    kt = qkv[:, :, 1].transpose(0, 2, 3, 1)   # (B, H, D, T)
    v = qkv[:, :, 2].transpose(0, 2, 1, 3)    # (B, H, T, D)

    if pad_mask is None:
        bias = jnp.zeros((B, 1, T), jnp.float32)
    else:
        bias = jnp.where(pad_mask, 0.0, -jnp.inf).astype(jnp.float32)
        bias = bias.reshape(B, 1, T)

    y = pallas_attention(q, kt, v, bias)      # (B, T, C) bf16, head-merged layout

    # output projection; attn/resid dropout are identity at p=0 (eval)
    out = pallas_linear(y.reshape(B * T, C), w_proj, b_proj, x.dtype)
    return out.reshape(B, T, C)


# ---------------------------------------------------------------------------
# Pure-JAX f32 reference for verification (PyTorch-layout weights)
# ---------------------------------------------------------------------------
def reference(x, w_attn, b_attn, w_proj, b_proj, n_head, pad_mask):
    B, T, C = x.shape
    D = C // n_head
    qkv = x @ w_attn.T + b_attn
    q, k, v = jnp.split(qkv, 3, axis=-1)
    q = q.reshape(B, T, n_head, D).transpose(0, 2, 1, 3)
    k = k.reshape(B, T, n_head, D).transpose(0, 2, 1, 3)
    v = v.reshape(B, T, n_head, D).transpose(0, 2, 1, 3)
    s = jnp.einsum("bhqd,bhkd->bhqk", q, k) / math.sqrt(D)
    if pad_mask is not None:
        s = s + jnp.where(pad_mask, 0.0, -jnp.inf)[:, None, None, :]
    p = jax.nn.softmax(s, axis=-1)
    y = jnp.einsum("bhqk,bhkd->bhqd", p, v)
    y = y.transpose(0, 2, 1, 3).reshape(B, T, C)
    return y @ w_proj.T + b_proj


if __name__ == "__main__":
    # Config: n_embd=32, n_head=4, bias=True, dropout=0.0
    B, T, C, H = 2, 8, 32, 4

    key = jax.random.PRNGKey(0)
    kx, k1, k2, k3, k4 = jax.random.split(key, 5)

    x = jax.random.normal(kx, (B, T, C), dtype=jnp.float32)

    # Parameters in PyTorch nn.Linear layout: weight (out_features, in_features)
    w_attn = 0.1 * jax.random.normal(k1, (3 * C, C), dtype=jnp.float32)
    b_attn = 0.1 * jax.random.normal(k2, (3 * C,), dtype=jnp.float32)
    w_proj = 0.1 * jax.random.normal(k3, (C, C), dtype=jnp.float32)
    b_proj = 0.1 * jax.random.normal(k4, (C,), dtype=jnp.float32)

    # pad_mask: True=keep, last two positions of batch 1 are padding
    pad_mask = jnp.ones((B, T), dtype=bool).at[1, -2:].set(False)

    prepared = prepare_params(w_attn, b_attn, w_proj, b_proj, H)
    out = non_causal_self_attention(x, prepared, H, pad_mask)
    out = jax.block_until_ready(out)

    ref = reference(x, w_attn, b_attn, w_proj, b_proj, H, pad_mask)
    assert out.shape == (B, T, C)
    # bf16 MXU inputs + approx reciprocal -> bf16-appropriate tolerances vs f32 ref
    max_err = float(jnp.max(jnp.abs(out - ref)))
    assert jnp.allclose(out, ref, rtol=2e-2, atol=2e-2), (
        f"mismatch vs reference: max abs diff {max_err}")

    print("KERNEL_OK")
</pallas_src>

<mosaic_0001>
module attributes {stable_mosaic.version = 11 : i64} {
  func.func @_linear_kernel(%arg0: i32, %arg1: memref<16x32xbf16, #tpu.memory_space<vmem>>, %arg2: memref<32x96xbf16, #tpu.memory_space<vmem>>, %arg3: memref<1x96xf32, #tpu.memory_space<vmem>>, %arg4: memref<16x96xbf16, #tpu.memory_space<vmem>>) attributes {dimension_semantics = [#tpu.dimension_semantics<parallel>], iteration_bounds = array<i64: 1>, scalar_prefetch = 0 : i64, scratch_operands = 0 : i64, tpu.core_type = #tpu.core_type<tc>, window_params = [{transform_indices = @transform_0, window_bounds = array<i64: 16, 32>}, {pipeline_mode = #tpu.pipeline_mode<synchronous>, transform_indices = @transform_1, window_bounds = array<i64: 32, 96>}, {pipeline_mode = #tpu.pipeline_mode<synchronous>, transform_indices = @transform_2, window_bounds = array<i64: 1, 96>}, {transform_indices = @transform_3, window_bounds = array<i64: 16, 96>}]} {
    %c0 = arith.constant 0 : index
    %c0_0 = arith.constant 0 : index
    %0 = vector.load %arg1[%c0, %c0_0] : memref<16x32xbf16, #tpu.memory_space<vmem>>, vector<16x32xbf16>
    %c0_1 = arith.constant 0 : index
    %c0_2 = arith.constant 0 : index
    %1 = vector.load %arg2[%c0_1, %c0_2] : memref<32x96xbf16, #tpu.memory_space<vmem>>, vector<32x96xbf16>
    %cst = arith.constant dense<0.000000e+00> : vector<16x96xf32>
    %2 = tpu.matmul %0, %1, %cst {dimension_numbers = #tpu.dot_dimension_numbers<[1], [0], [0], [1], [0, 0, 1, 1], [], []>} : vector<16x32xbf16>, vector<32x96xbf16>, vector<16x96xf32> -> vector<16x96xf32>
    %c0_3 = arith.constant 0 : index
    %c0_4 = arith.constant 0 : index
    %3 = vector.load %arg3[%c0_3, %c0_4] : memref<1x96xf32, #tpu.memory_space<vmem>>, vector<1x96xf32>
    %4 = vector.broadcast %3 : vector<1x96xf32> to vector<16x96xf32>
    %5 = arith.addf %2, %4 : vector<16x96xf32>
    %6 = arith.truncf %5 : vector<16x96xf32> to vector<16x96xbf16>
    %c0_5 = arith.constant 0 : index
    %c0_6 = arith.constant 0 : index
    %7 = vector.load %arg4[%c0_5, %c0_6] : memref<16x96xbf16, #tpu.memory_space<vmem>>, vector<16x96xbf16>
    tpu.vector_store %arg4[%c0_5, %c0_6], %6 {strides = array<i32>} : memref<16x96xbf16, #tpu.memory_space<vmem>>, vector<16x96xbf16>,
    return
  }
  func.func @transform_0(%arg0: i32) -> (i32, i32) {
    %c0_i32 = arith.constant 0 : i32
    %c0_i32_0 = arith.constant 0 : i32
    return %arg0, %c0_i32 : i32, i32
  }
  func.func @transform_1(%arg0: i32) -> (i32, i32) {
    %c0_i32 = arith.constant 0 : i32
    %c0_i32_0 = arith.constant 0 : i32
    %c0_i32_1 = arith.constant 0 : i32
    return %c0_i32, %c0_i32_0 : i32, i32
  }
  func.func @transform_2(%arg0: i32) -> (i32, i32) {
    %c0_i32 = arith.constant 0 : i32
    %c0_i32_0 = arith.constant 0 : i32
    %c0_i32_1 = arith.constant 0 : i32
    return %c0_i32, %c0_i32_0 : i32, i32
  }
  func.func @transform_3(%arg0: i32) -> (i32, i32) {
    %c0_i32 = arith.constant 0 : i32
    %c0_i32_0 = arith.constant 0 : i32
    return %arg0, %c0_i32 : i32, i32
  }
}

</mosaic_0001>

<llo_original>
// kernel: tpu_custom_call.1
$region0: #{tpu_custom_call.1}
  #allocation0 [shape = 'u32[]', space=smem, size = 0x4, offset = 0x4, fixed_abs, tag = 'smem constant byte address 0x4 - core index']
  #allocation1 [shape = 'u32[144,128]{1,0:T(1,128)}', space=vmem, size = 0x12000, scoped, tag = 'internal scratch']
  %s0 = inlined_call_operand.hbm [shape: bf16[16,32], index: 0, kind: input, shape index: {}]
  %s1 = inlined_call_operand.hbm [shape: bf16[32,96], index: 1, kind: input, shape index: {}]
  %s2 = inlined_call_operand.vmem [shape: f32[1,96], index: 2, kind: input, shape index: {}]
  %s3 = inlined_call_operand.hbm [shape: bf16[16,96], index: 3, kind: output, shape index: {}]
  %s4 = sld [smem:[#allocation0]]
  $region30: #{tpu_custom_call.1} parent=0
    _
  %s6 = ssub.s32 1, %s4
  %s7 = scalar_select 0, %s6, %s4
  $region1: #{tpu_custom_call.1} parent=0
    #allocation2 [shape = 'u8[4096]{0}', space=vmem, size = 0x1000, scoped, tag = 'input window, operand 0, single buffered']
    #allocation3 [shape = 's32[1]{0}', space=sflag, size = 0x4, scoped, tag = 'scoped memory for tpu_custom_call.1']
    #allocation4 [shape = 's32[1]{0}', space=sflag, size = 0x4, scoped, tag = 'scoped memory for tpu_custom_call.1']
    #allocation5 [shape = 'u8[8192]{0}', space=vmem, size = 0x2000, scoped, tag = 'input window, operand 1, single buffered']
    #allocation6 [shape = 's32[1]{0}', space=sflag, size = 0x4, scoped, tag = 'scoped memory for tpu_custom_call.1']
    #allocation7 [shape = 'u8[4096]{0}', space=vmem, size = 0x1000, scoped, tag = 'output window, operand 0, single buffered']
    %8 = vsyncpa [#allocation3], 0
    %9 = vsyncpa [#allocation6], 0
    %10 = vsyncpa [#allocation4], 0
    // Predicated region
    $region2: #{tpu_custom_call.1} parent=1 // pred_check
      _
    $region3: #{tpu_custom_call.1} parent=1 // pred_check_branch
      %12 = sbr.rel (0) target = $region5
    $region4: #{tpu_custom_call.1} parent=1 // pred_region
      %s14 = ssub.s32 128, 128
      %15 = vsyncadd [#allocation3], %s14
      %s16 = sshll.u32 [#allocation2], 4
      %s17 = int_to_ptr.vmem [resolvable:$true] %s16
      %22 = dma.hbm_to_vmem [thread:$0]  %s0, 128, %s17, [#allocation3], 64, 64, 4
    $region5: #{tpu_custom_call.1} parent=1 // pred_fallthru
      _
    // Predicated region
    $region6: #{tpu_custom_call.1} parent=1 // pred_check
      _
    $region7: #{tpu_custom_call.1} parent=1 // pred_check_branch
      %24 = sbr.rel (0) target = $region9
    $region8: #{tpu_custom_call.1} parent=1 // pred_region
      %s26 = ssub.s32 256, 256
      %27 = vsyncadd [#allocation6], %s26
      %s28 = sshll.u32 [#allocation5], 4
      %s29 = int_to_ptr.vmem [resolvable:$true] %s28
      %34 = dma.hbm_to_vmem [thread:$0]  %s1, 256, %s29, [#allocation6], 64, 64, 4
    $region9: #{tpu_custom_call.1} parent=1 // pred_fallthru
      _
    // Predicated region
    $region10: #{tpu_custom_call.1} parent=1 // pred_check
      _
    $region11: #{tpu_custom_call.1} parent=1 // pred_check_branch
      %36 = sbr.rel (0) target = $region13
    $region12: #{tpu_custom_call.1} parent=1 // pred_region
      _
    $region13: #{tpu_custom_call.1} parent=1 // pred_fallthru
      _
    // Predicated region
    $region14: #{tpu_custom_call.1} parent=1 // pred_check
      _
    $region15: #{tpu_custom_call.1} parent=1 // pred_check_branch
      %38 = sbr.rel (0) target = $region17
    $region16: #{tpu_custom_call.1} parent=1 // pred_region
      %39 = dma.done [#allocation3], 128
    $region17: #{tpu_custom_call.1} parent=1 // pred_fallthru
      _
    // Predicated region
    $region18: #{tpu_custom_call.1} parent=1 // pred_check
      _
    $region19: #{tpu_custom_call.1} parent=1 // pred_check_branch
      %41 = sbr.rel (0) target = $region21
    $region20: #{tpu_custom_call.1} parent=1 // pred_region
      %42 = dma.done [#allocation6], 256
    $region21: #{tpu_custom_call.1} parent=1 // pred_fallthru
      _
    %v44 = vld [vmem:[#allocation2] sm:$0xf]
    %v45 = vld [vmem:[#allocation2 + $0x4] sm:$0xf]
    %v46 = vld [vmem:[#allocation5] sm:$0xf]
    %v47 = vld [vmem:[#allocation5 + $0x4] sm:$0xf]
    %v48 = vld [vmem:[#allocation5 + $0x8] sm:$0xf]
    %v49 = vld [vmem:[#allocation5 + $0xc] sm:$0xf]
    %v50 = vld [vmem:[%s2] sm:$0x1]
    %v52 = vlaneseq
    %v53 = vshrl.u32 %v52, 7
    %v54 = vsub.s32 0, %v53
    %v55 = vrot.slane %v50, %v54
    %v59 = vunpack.c.l.b16 %v44
    %v60 = vunpack.c.l.b16 %v45
    %v61 = vpack.c.b16 %v60, %v59
    %v66 = vunpack.c.l.b16 %v46
    %v67 = vunpack.c.l.b16 %v47
    %v68 = vunpack.c.l.b16 %v48
    %v69 = vunpack.c.l.b16 %v49
    %v70 = vpack.c.b16 %v67, %v66
    %v71 = vpack.c.b16 %v69, %v68
    %vm74 = vcmask 261120
    %v76 = vsel %vm74, %v61, 0
    %78 = vmatprep.subr.bf16.mxu0 0
    %79 = vmatpush1.bf16.msra.mxu0 0
    %80 = vmatprep.subr.bf16.mxu0 0
    %81 = vmatpush1.bf16.msra.mxu0 0
    %82 = vmatprep.subr.bf16.mxu0 0
    %83 = vmatpush1.bf16.msra.mxu0 0
    %84 = vmatprep.subr.bf16.mxu0 0
    %85 = vmatpush1.bf16.msra.mxu0 0
    %86 = vmatprep.subr.bf16.mxu0 0
    %87 = vmatpush1.bf16.msra.mxu0 0
    %88 = vmatprep.subr.bf16.mxu0 0
    %89 = vmatpush1.bf16.msra.mxu0 0
    %90 = vmatprep.subr.bf16.mxu0 0
    %91 = vmatpush1.bf16.msra.mxu0 %v71
    %92 = vmatprep.subr.bf16.mxu0 0
    %93 = vmatpush1.bf16.msra.mxu0 %v70
    %94 = vmatprep.subr.bf16.mxu0 0
    %95 = vmatpush2.bf16.msra.mxu0 0
    %96 = vmatprep.subr.bf16.mxu0 0
    %97 = vmatpush2.bf16.msra.mxu0 0
    %98 = vmatprep.subr.bf16.mxu0 0
    %99 = vmatpush2.bf16.msra.mxu0 0
    %100 = vmatprep.subr.bf16.mxu0 0
    %101 = vmatpush2.bf16.msra.mxu0 0
    %102 = vmatprep.subr.bf16.mxu0 0
    %103 = vmatpush2.bf16.msra.mxu0 0
    %104 = vmatprep.subr.bf16.mxu0 0
    %105 = vmatpush2.bf16.msra.mxu0 0
    %106 = vmatprep.subr.bf16.mxu0 0
    %107 = vmatpush2.bf16.msra.mxu0 0
    %108 = vmatprep.subr.bf16.mxu0 0
    %109 = vmatpush2.bf16.msra.mxu0 0
    %110 = vmatprep.mubr.bf16.mxu0 0
    %111 = vmatmul.mubr.bf16.gmra.mxu0 %v76
    %v112 = vpop.f32.mrf.mxu0
    %v113 = vadd.f32 %v55, %v112
    %v114 = vpop.f32.mrf.mxu0
    %v115 = vpop.f32.mrf.mxu0
    %v116 = vadd.f32 %v55, %v115
    %v117 = vpop.f32.mrf.mxu0
    %118 = vdwg.mxu0
    %v119 = vpack.c.bf16 %v116, %v113
    %v121 = vunpack.c.l.b16 %v119
    %v122 = vunpack.c.h.b16 %v119
    %v123 = vpack.c.b16 %v121, %v121
    %v124 = vpack.c.b16 %v122, %v122
    %vm127 = vcmask 781312
    %128 = vst.msk [vmem:[#allocation7] sm:$0xf] %vm127, %v123
    %129 = vst.msk [vmem:[#allocation7 + $0x4] sm:$0xf] %vm127, %v124
    // Predicated region
    $region22: #{tpu_custom_call.1} parent=1 // pred_check
      _
    $region23: #{tpu_custom_call.1} parent=1 // pred_check_branch
      %131 = sbr.rel (0) target = $region25
    $region24: #{tpu_custom_call.1} parent=1 // pred_region
      %s133 = ssub.s32 128, 128
      %134 = vsyncadd [#allocation4], %s133
      %s135 = sshll.u32 [#allocation7], 4
      %s136 = int_to_ptr.vmem [resolvable:$true] %s135
      %141 = dma.vmem_to_hbm [thread:$0]  %s136, 128, %s3, [#allocation4], 64, 64, 4
    $region25: #{tpu_custom_call.1} parent=1 // pred_fallthru
      _
    // Predicated region
    $region26: #{tpu_custom_call.1} parent=1 // pred_check
      _
    $region27: #{tpu_custom_call.1} parent=1 // pred_check_branch
      %143 = sbr.rel (0) target = $region29
    $region28: #{tpu_custom_call.1} parent=1 // pred_region
      %144 = dma.done [#allocation4], 128
    $region29: #{tpu_custom_call.1} parent=1 // pred_fallthru
      _
    %145 = vsyncpa [#allocation3], 1
    %146 = vsyncpa [#allocation6], 1
    %147 = vsyncpa [#allocation4], 1

</llo_original>
